<compile_context>
chip_gen: v5e
topology: v5e:2x2
jax: 0.10.0
libtpu: 0.0.40
codegen_flags: <defaults>
</compile_context>

<pallas_src>
import functools
import math

import jax
import jax.numpy as jnp
from jax.experimental import pallas as pl
from jax.experimental.pallas import tpu as pltpu

_LANES = 128
_SUBLANES = 8


def _dropout_kernel(pe_ref, bits_ref, out_ref, *, threshold, scale):
    """Inverted dropout on a lane-dense slab: keep iff bits >= threshold, scale by 1/(1-p)."""
    x = pe_ref[...]
    keep = bits_ref[...] >= jnp.uint32(threshold)
    out_ref[...] = jnp.where(keep, x * jnp.asarray(scale, x.dtype), jnp.zeros((), x.dtype))


def init_positional_encoding(dim, max_len=192, dtype=jnp.float32):
    """Deterministic parameter init, identical to the PyTorch __init__ (dim must be even)."""
    position = jnp.arange(max_len, dtype=jnp.float32)[:, None]                 # (max_len, 1)
    div_term = jnp.exp(
        jnp.arange(0, dim, 2, dtype=jnp.float32) * (-math.log(10000.0) / dim)  # (dim/2,)
    )
    pe = jnp.zeros((max_len, dim), dtype=jnp.float32)
    pe = pe.at[:, 0::2].set(jnp.sin(position * div_term))
    pe = pe.at[:, 1::2].set(jnp.cos(position * div_term))
    return pe.reshape(max_len, 1, dim).astype(dtype)                           # (max_len, 1, dim)


def positional_encoding_forward(pe, l, *, p=0.1, training=False, rng=None):
    """Equivalent of PositionalEncoding.forward(l): returns (l, 1, dim)."""
    max_len, _, dim = pe.shape
    assert 0 < l <= max_len

    # Eval mode (or p == 0): dropout is the identity -> skip the kernel launch entirely.
    if not training or p == 0.0:
        return pe[:l]

    if rng is None:
        rng = jax.random.PRNGKey(0)

    # --- glue: lane-dense slab (rows, 128), zero-padded to a whole number of (8,128) vregs ---
    n = l * dim
    n_pad = pl.cdiv(n, _SUBLANES * _LANES) * (_SUBLANES * _LANES)
    flat = pe[:l, 0, :].reshape(-1)
    flat = jnp.pad(flat, (0, n_pad - n))
    slab = flat.reshape(n_pad // _LANES, _LANES)

    # Random bits from the functional JAX PRNG (portable: TPU hardware and interpret mode).
    bits = jax.random.bits(rng, slab.shape, dtype=jnp.uint32)

    threshold = min(int(round(p * 2.0 ** 32)), 2 ** 32 - 1)   # P(bits < threshold) == p
    kernel = functools.partial(_dropout_kernel, threshold=threshold, scale=1.0 / (1.0 - p))

    out_slab = pl.pallas_call(
        kernel,
        out_shape=jax.ShapeDtypeStruct(slab.shape, pe.dtype),
        grid=(1,),
        in_specs=[
            pl.BlockSpec(slab.shape, lambda i: (0, 0)),
            pl.BlockSpec(slab.shape, lambda i: (0, 0)),
        ],
        out_specs=pl.BlockSpec(slab.shape, lambda i: (0, 0)),
    )(slab, bits)

    # TODO(synk): optionally fuse the downstream `x + dropout(pe[:l])` embedding add into this
    # kernel to save an HBM round-trip (the add is intentionally NOT done here, as in the module).
    return out_slab.reshape(-1)[:n].reshape(l, 1, dim)


if __name__ == "__main__":
    key = jax.random.PRNGKey(0)
    dim, max_len, p = 32, 192, 0.1

    # Deterministic "parameter" (sinusoidal table), exactly as the module's __init__.
    pe = init_positional_encoding(dim, max_len=max_len)

    # Eval-mode forward: identity (no kernel launch), must equal pe[:l].
    l = 8
    out_eval = jax.block_until_ready(positional_encoding_forward(pe, l, p=p, training=False))
    assert out_eval.shape == (l, 1, dim)
    assert jnp.allclose(out_eval, pe[:l], atol=1e-6)

    # Training-mode forward: Pallas inverted-dropout kernel on a lane-dense slab.
    out_train = jax.block_until_ready(
        positional_encoding_forward(pe, l, p=p, training=True, rng=key))
    assert out_train.shape == (l, 1, dim)
    scaled = pe[:l] / (1.0 - p)
    ok = jnp.isclose(out_train, scaled, atol=1e-5) | (out_train == 0.0)
    assert bool(jnp.all(ok))
    assert bool(jnp.any(out_train != 0.0))   # mask is not degenerate

    # l that is NOT a multiple of 8 is supported too (internal padding handles it).
    l2 = 7
    out_train2 = jax.block_until_ready(
        positional_encoding_forward(pe, l2, p=p, training=True, rng=jax.random.fold_in(key, 1)))
    assert out_train2.shape == (l2, 1, dim)
    scaled2 = pe[:l2] / (1.0 - p)
    assert bool(jnp.all(jnp.isclose(out_train2, scaled2, atol=1e-5) | (out_train2 == 0.0)))

    print("KERNEL_OK")
</pallas_src>

<mosaic_0001>
module attributes {stable_mosaic.version = 11 : i64} {
  func.func @_dropout_kernel(%arg0: i32, %arg1: memref<8x128xf32, #tpu.memory_space<vmem>>, %arg2: memref<8x128xi32, #tpu.memory_space<vmem>>, %arg3: memref<8x128xf32, #tpu.memory_space<vmem>>) attributes {dimension_semantics = [#tpu.dimension_semantics<arbitrary>], iteration_bounds = array<i64: 1>, scalar_prefetch = 0 : i64, scratch_operands = 0 : i64, tpu.core_type = #tpu.core_type<tc>, window_params = [{pipeline_mode = #tpu.pipeline_mode<synchronous>, transform_indices = @transform_0, window_bounds = array<i64: 8, 128>}, {pipeline_mode = #tpu.pipeline_mode<synchronous>, transform_indices = @transform_1, window_bounds = array<i64: 8, 128>}, {pipeline_mode = #tpu.pipeline_mode<synchronous>, transform_indices = @transform_2, window_bounds = array<i64: 8, 128>}]} {
    %c0 = arith.constant 0 : index
    %c0_0 = arith.constant 0 : index
    %0 = vector.load %arg1[%c0, %c0_0] : memref<8x128xf32, #tpu.memory_space<vmem>>, vector<8x128xf32>
    %c0_1 = arith.constant 0 : index
    %c0_2 = arith.constant 0 : index
    %1 = vector.load %arg2[%c0_1, %c0_2] : memref<8x128xi32, #tpu.memory_space<vmem>>, vector<8x128xi32>
    %c429496730_i32 = arith.constant 429496730 : i32
    %2 = vector.broadcast %c429496730_i32 : i32 to vector<8x128xi32>
    %3 = arith.cmpi uge, %1, %2 : vector<8x128xi32>
    %cst = arith.constant 1.11111116 : f32
    %4 = vector.broadcast %cst : f32 to vector<8x128xf32>
    %5 = arith.mulf %0, %4 : vector<8x128xf32>
    %cst_3 = arith.constant 0.000000e+00 : f32
    %6 = vector.broadcast %cst_3 : f32 to vector<8x128xf32>
    %7 = arith.select %3, %5, %6 : vector<8x128xi1>, vector<8x128xf32>
    %c0_4 = arith.constant 0 : index
    %c0_5 = arith.constant 0 : index
    %8 = vector.load %arg3[%c0_4, %c0_5] : memref<8x128xf32, #tpu.memory_space<vmem>>, vector<8x128xf32>
    tpu.vector_store %arg3[%c0_4, %c0_5], %7 {strides = array<i32>} : memref<8x128xf32, #tpu.memory_space<vmem>>, vector<8x128xf32>,
    return
  }
  func.func @transform_0(%arg0: i32) -> (i32, i32) {
    %c0_i32 = arith.constant 0 : i32
    %c0_i32_0 = arith.constant 0 : i32
    %c0_i32_1 = arith.constant 0 : i32
    return %c0_i32, %c0_i32_0 : i32, i32
  }
  func.func @transform_1(%arg0: i32) -> (i32, i32) {
    %c0_i32 = arith.constant 0 : i32
    %c0_i32_0 = arith.constant 0 : i32
    %c0_i32_1 = arith.constant 0 : i32
    return %c0_i32, %c0_i32_0 : i32, i32
  }
  func.func @transform_2(%arg0: i32) -> (i32, i32) {
    %c0_i32 = arith.constant 0 : i32
    %c0_i32_0 = arith.constant 0 : i32
    %c0_i32_1 = arith.constant 0 : i32
    return %c0_i32, %c0_i32_0 : i32, i32
  }
}

</mosaic_0001>

<llo_original>
// kernel: tpu_custom_call.1
$region0: #{tpu_custom_call.1}
  #allocation0 [shape = 'u32[]', space=smem, size = 0x4, offset = 0x4, fixed_abs, tag = 'smem constant byte address 0x4 - core index']
  #allocation1 [shape = 'u32[72,128]{1,0:T(1,128)}', space=vmem, size = 0x9000, scoped, tag = 'internal scratch']
  %s0 = inlined_call_operand.hbm [shape: f32[8,128], index: 0, kind: input, shape index: {}]
  %s1 = inlined_call_operand.hbm [shape: u32[8,128], index: 1, kind: input, shape index: {}]
  %s2 = inlined_call_operand.hbm [shape: f32[8,128], index: 2, kind: output, shape index: {}]
  %s3 = sld [smem:[#allocation0]]
  $region26: #{tpu_custom_call.1} parent=0
    _
  %s5 = ssub.s32 1, %s3
  %s6 = scalar_select 0, %s5, %s3
  $region1: #{tpu_custom_call.1} parent=0
    #allocation2 [shape = 'u8[4096]{0}', space=vmem, size = 0x1000, scoped, tag = 'input window, operand 0, single buffered']
    #allocation3 [shape = 's32[1]{0}', space=sflag, size = 0x4, scoped, tag = 'scoped memory for tpu_custom_call.1']
    #allocation4 [shape = 's32[1]{0}', space=sflag, size = 0x4, scoped, tag = 'scoped memory for tpu_custom_call.1']
    #allocation5 [shape = 'u8[4096]{0}', space=vmem, size = 0x1000, scoped, tag = 'input window, operand 1, single buffered']
    #allocation6 [shape = 's32[1]{0}', space=sflag, size = 0x4, scoped, tag = 'scoped memory for tpu_custom_call.1']
    #allocation7 [shape = 'u8[4096]{0}', space=vmem, size = 0x1000, scoped, tag = 'output window, operand 0, single buffered']
    %7 = vsyncpa [#allocation3], 0
    %8 = vsyncpa [#allocation6], 0
    %9 = vsyncpa [#allocation4], 0
    // Predicated region
    $region2: #{tpu_custom_call.1} parent=1 // pred_check
      _
    $region3: #{tpu_custom_call.1} parent=1 // pred_check_branch
      %11 = sbr.rel (0) target = $region5
    $region4: #{tpu_custom_call.1} parent=1 // pred_region
      %13 = vsyncadd [#allocation3], 0
      %s15 = sshll.u32 %s0, 4
      %s16 = int_to_ptr.hbm [resolvable:$true] %s15
      %s17 = sshll.u32 [#allocation2], 4
      %s18 = int_to_ptr.vmem [resolvable:$true] %s17
      %20 = dma.hbm_to_vmem [thread:$0]  %s16, 128, %s18, [#allocation3]
    $region5: #{tpu_custom_call.1} parent=1 // pred_fallthru
      _
    // Predicated region
    $region6: #{tpu_custom_call.1} parent=1 // pred_check
      _
    $region7: #{tpu_custom_call.1} parent=1 // pred_check_branch
      %22 = sbr.rel (0) target = $region9
    $region8: #{tpu_custom_call.1} parent=1 // pred_region
      %24 = vsyncadd [#allocation6], 0
      %s26 = sshll.u32 %s1, 4
      %s27 = int_to_ptr.hbm [resolvable:$true] %s26
      %s28 = sshll.u32 [#allocation5], 4
      %s29 = int_to_ptr.vmem [resolvable:$true] %s28
      %31 = dma.hbm_to_vmem [thread:$0]  %s27, 128, %s29, [#allocation6]
    $region9: #{tpu_custom_call.1} parent=1 // pred_fallthru
      _
    // Predicated region
    $region10: #{tpu_custom_call.1} parent=1 // pred_check
      _
    $region11: #{tpu_custom_call.1} parent=1 // pred_check_branch
      %33 = sbr.rel (0) target = $region13
    $region12: #{tpu_custom_call.1} parent=1 // pred_region
      %35 = dma.done [#allocation3], 128
    $region13: #{tpu_custom_call.1} parent=1 // pred_fallthru
      _
    // Predicated region
    $region14: #{tpu_custom_call.1} parent=1 // pred_check
      _
    $region15: #{tpu_custom_call.1} parent=1 // pred_check_branch
      %37 = sbr.rel (0) target = $region17
    $region16: #{tpu_custom_call.1} parent=1 // pred_region
      %39 = dma.done [#allocation6], 128
    $region17: #{tpu_custom_call.1} parent=1 // pred_fallthru
      _
    %v40 = vld [vmem:[#allocation2] sm:$0xff]
    %v41 = vld [vmem:[#allocation5] sm:$0xff]
    %v42 = vadd.s32 %v41, 2147483648
    %vm44 = vcmp.ge.s32.totalorder %v42, 2576980378
    %v45 = vmul.f32 %v40, 1.1111112
    %v46 = vsel %vm44, %v45, 0.0
    %47 = vst [vmem:[#allocation7] sm:$0xff] %v46
    // Predicated region
    $region18: #{tpu_custom_call.1} parent=1 // pred_check
      _
    $region19: #{tpu_custom_call.1} parent=1 // pred_check_branch
      %49 = sbr.rel (0) target = $region21
    $region20: #{tpu_custom_call.1} parent=1 // pred_region
      %51 = vsyncadd [#allocation4], 0
      %s53 = sshll.u32 [#allocation7], 4
      %s54 = int_to_ptr.vmem [resolvable:$true] %s53
      %s55 = sshll.u32 %s2, 4
      %s56 = int_to_ptr.hbm [resolvable:$true] %s55
      %58 = dma.vmem_to_hbm [thread:$0]  %s54, 128, %s56, [#allocation4]
    $region21: #{tpu_custom_call.1} parent=1 // pred_fallthru
      _
    // Predicated region
    $region22: #{tpu_custom_call.1} parent=1 // pred_check
      _
    $region23: #{tpu_custom_call.1} parent=1 // pred_check_branch
      %60 = sbr.rel (0) target = $region25
    $region24: #{tpu_custom_call.1} parent=1 // pred_region
      %62 = dma.done [#allocation4], 128
    $region25: #{tpu_custom_call.1} parent=1 // pred_fallthru
      _
    %63 = vsyncpa [#allocation3], 1
    %64 = vsyncpa [#allocation6], 1
    %65 = vsyncpa [#allocation4], 1

</llo_original>
